<compile_context>
chip_gen: v7x
topology: tpu7x:2x2x1
jax: 0.10.0
libtpu: 0.0.40
codegen_flags: <defaults>
</compile_context>

<pallas_src>
import functools
import math

import jax
import jax.numpy as jnp
from jax.experimental import pallas as pl
from jax.experimental.pallas import tpu as pltpu

# Conservative count of simultaneously-live [tile_n, C] f32 intermediates
# produced by the dense elementwise chain (cast/sel/pt/log/om/loss).
_N_LIVE_F32 = 6


def _round_up(x, m):
    return ((x + m - 1) // m) * m


def _choose_tile_n(n, c, itemsize, *,
                   vmem_budget_bytes=40 * 1024 * 1024,
                   max_probs_buf_bytes=16 * 1024 * 1024,
                   row_multiple=16):
    """Largest batch tile (multiple of 16 rows) within the VMEM budget.

    Budget accounts for: 2x probs tile (double-buffered, native dtype),
    2x lane-padded (tile_n, 1) int32 target block (512 B/row), and the dense
    f32 intermediates of the kernel body.  Also guarantees >= 2 grid blocks
    when the batch is large enough, so v7x's two TensorCores both get work.
    """
    per_row = (2 * c * itemsize          # double-buffered probs tile
               + 2 * 128 * 4             # double-buffered lane-padded target
               + _N_LIVE_F32 * c * 4)    # dense f32 intermediates
    rows = vmem_budget_bytes // per_row
    rows = min(rows, max(1, max_probs_buf_bytes // (c * itemsize)))
    rows = max(row_multiple, (rows // row_multiple) * row_multiple)
    if n <= rows:
        if n >= 2 * row_multiple:
            # Split into (at least) two blocks for v7x megacore parallelism.
            rows = _round_up(-(-n // 2), row_multiple)
        else:
            rows = n  # full-extent block is always a legal block shape
    return rows


def _ratio_loss_kernel(probs_ref, target_ref, partial_ref, *, gamma, threshold,
                       n, tile_n):
    i = pl.program_id(0)
    probs = probs_ref[...].astype(jnp.float32)   # [TILE_N, C], upcast in-reg
    tgt = target_ref[...]                        # [TILE_N, 1] i32
    tn, c = probs.shape

    # Neutralise padded rows of a ragged last block: force their target index
    # to -1 so it never matches any column (col iota >= 0).
    row = jax.lax.broadcasted_iota(jnp.int32, (tn, 1), 0) + i * tile_n
    tgt_eff = jnp.where(row < n, tgt, -1)        # [TILE_N, 1]

    # Dense one-hot selection; mask to 1.0 BEFORE the log so log(0) / log of
    # garbage padded values is never produced.  Non-selected entries have
    # log(pt)=0 and therefore contribute exactly 0 to the loss.
    col = jax.lax.broadcasted_iota(jnp.int32, (tn, c), 1)
    sel = col == tgt_eff                         # [TILE_N, C] bool
    pt = jnp.where(sel, probs, 1.0)              # [TILE_N, C]

    ln_pt = jnp.log(pt)                          # natural log; /ln2 in wrapper

    # (1 - Pt)**gamma: integer gamma as repeated multiplies (stays on VPU).
    om = 1.0 - pt                                # 0 at non-selected entries
    if isinstance(gamma, int) and not isinstance(gamma, bool) and gamma >= 0:
        if gamma == 0:
            om_pow = jnp.ones_like(om)
        else:
            om_pow = om
            for _ in range(gamma - 1):
                om_pow = om_pow * om
    else:
        om_pow = om ** gamma

    # Ratio gate: 1 where target index > threshold.  Broadcast over columns is
    # harmless since ln_pt == 0 everywhere except the target column; padded
    # rows have ln_pt == 0 everywhere, so their gate value is irrelevant.
    gate = (tgt_eff > threshold).astype(jnp.float32)   # [TILE_N, 1]

    # loss = -((1-Pt)^g + gate) * ln(Pt); negate once in the reduction.
    partial = -jnp.sum((om_pow + gate) * ln_pt)

    # Lane-dense (1, 8, 128) partial-sum block; wrapper reads [:, 0, 0].
    partial_ref[...] = jnp.broadcast_to(partial, partial_ref.shape).astype(
        jnp.float32)


def ratio_loss(probs, target, *, threshold, gamma=2, reduction="mean",
               tile_n=None):
    """probs: [N, C] float (f32 or bf16), target: [N] or [N,1] int. Scalar f32."""
    # Stream bf16/f32 natively (kernel upcasts after the DMA); anything else
    # falls back to f32.
    if probs.dtype not in (jnp.bfloat16, jnp.float32):
        probs = probs.astype(jnp.float32)
    n, c = probs.shape
    target2d = target.reshape(n, 1).astype(jnp.int32)
    itemsize = probs.dtype.itemsize

    if tile_n is None:
        tile_n = _choose_tile_n(n, c, itemsize)
    num_blocks = pl.cdiv(n, tile_n)

    kernel = functools.partial(
        _ratio_loss_kernel,
        gamma=gamma,
        threshold=threshold,
        n=n,
        tile_n=tile_n,
    )

    # Double-buffered probs + lane-padded target blocks + dense f32
    # intermediates + output blocks + compiler-scratch headroom.
    vmem_bytes = (2 * tile_n * c * itemsize
                  + 2 * tile_n * 128 * 4
                  + _N_LIVE_F32 * tile_n * c * 4
                  + 2 * 8 * 128 * 4
                  + (4 << 20))
    vmem_bytes = min(int(vmem_bytes), 128 << 20)

    partials = pl.pallas_call(
        kernel,
        out_shape=jax.ShapeDtypeStruct((num_blocks, 8, 128), jnp.float32),
        grid=(num_blocks,),
        in_specs=[
            pl.BlockSpec((tile_n, c), lambda i: (i, 0)),   # probs tile
            pl.BlockSpec((tile_n, 1), lambda i: (i, 0)),   # target tile
        ],
        out_specs=pl.BlockSpec((1, 8, 128), lambda i: (i, 0, 0)),
        compiler_params=pltpu.CompilerParams(
            dimension_semantics=("parallel",),
            vmem_limit_bytes=vmem_bytes,
        ),
    )(probs, target2d)

    # Kernel summed natural-log losses; one scale by 1/ln2 gives log2 units.
    total = jnp.sum(partials[:, 0, 0]) * (1.0 / math.log(2.0))
    if reduction == "mean":
        return total / n
    return total


def _ratio_loss_ref(probs, target, *, threshold, gamma=2, reduction="mean"):
    """Pure-JAX reference mirroring the PyTorch forward."""
    probs = probs.astype(jnp.float32)
    pt_index = target.reshape(-1)
    pt = probs[jnp.arange(probs.shape[0]), pt_index]
    log2_pt = jnp.log(pt) / jnp.log(2.0)
    fl = -((1.0 - pt) ** gamma) * log2_pt
    gate = jnp.where(pt_index > threshold, 1.0, 0.0)
    loss = fl - gate * log2_pt
    if reduction == "mean":
        return jnp.mean(loss)
    return jnp.sum(loss)


if __name__ == "__main__":
    key = jax.random.PRNGKey(0)
    k1, k2, k3, k4, k5, k6 = jax.random.split(key, 6)

    # Test 1: small f32 batch, single grid block, mean reduction.
    N1, C1 = 8, 32
    probs1 = jax.nn.softmax(jax.random.normal(k1, (N1, C1), jnp.float32), axis=1)
    target1 = jax.random.randint(k2, (N1, 1), 0, C1, dtype=jnp.int32)
    out1 = jax.block_until_ready(
        ratio_loss(probs1, target1, threshold=10, gamma=2, reduction="mean"))
    ref1 = _ratio_loss_ref(probs1, target1, threshold=10, gamma=2,
                           reduction="mean")
    assert jnp.allclose(out1, ref1, rtol=1e-5, atol=1e-5), (out1, ref1)

    # Test 2: bf16 streaming, multi-block grid, ragged masked last block, sum.
    N2, C2 = 36, 32
    probs2 = jax.nn.softmax(jax.random.normal(k3, (N2, C2), jnp.float32),
                            axis=1).astype(jnp.bfloat16)
    target2 = jax.random.randint(k4, (N2, 1), 0, C2, dtype=jnp.int32)
    out2 = jax.block_until_ready(
        ratio_loss(probs2, target2, threshold=3, gamma=2, reduction="sum",
                   tile_n=16))
    ref2 = _ratio_loss_ref(probs2, target2, threshold=3, gamma=2,
                           reduction="sum")
    assert jnp.allclose(out2, ref2, rtol=1e-5, atol=1e-4), (out2, ref2)

    # Test 3: bf16, auto tiling -> heuristic splits into >=2 blocks (megacore).
    N3, C3 = 64, 32
    probs3 = jax.nn.softmax(jax.random.normal(k5, (N3, C3), jnp.float32),
                            axis=1).astype(jnp.bfloat16)
    target3 = jax.random.randint(k6, (N3, 1), 0, C3, dtype=jnp.int32)
    out3 = jax.block_until_ready(
        ratio_loss(probs3, target3, threshold=15, gamma=2, reduction="mean"))
    ref3 = _ratio_loss_ref(probs3, target3, threshold=15, gamma=2,
                           reduction="mean")
    assert jnp.allclose(out3, ref3, rtol=1e-5, atol=1e-5), (out3, ref3)

    print("KERNEL_OK")
</pallas_src>

<mosaic_0001>
module attributes {stable_mosaic.version = 11 : i64} {
  func.func @_ratio_loss_kernel(%arg0: i32, %arg1: memref<8x32xf32, #tpu.memory_space<vmem>>, %arg2: memref<8x1xi32, #tpu.memory_space<vmem>>, %arg3: memref<1x8x128xf32, #tpu.memory_space<vmem>>) attributes {dimension_semantics = [#tpu.dimension_semantics<parallel>], iteration_bounds = array<i64: 1>, scalar_prefetch = 0 : i64, scratch_operands = 0 : i64, tpu.core_type = #tpu.core_type<tc>, window_params = [{transform_indices = @transform_0, window_bounds = array<i64: 8, 32>}, {transform_indices = @transform_1, window_bounds = array<i64: 8, 1>}, {transform_indices = @transform_2, window_bounds = array<i64: 1, 8, 128>}]} {
    %c0 = arith.constant 0 : index
    %c0_0 = arith.constant 0 : index
    %0 = vector.load %arg1[%c0, %c0_0] : memref<8x32xf32, #tpu.memory_space<vmem>>, vector<8x32xf32>
    %c0_1 = arith.constant 0 : index
    %c0_2 = arith.constant 0 : index
    %1 = vector.load %arg2[%c0_1, %c0_2] : memref<8x1xi32, #tpu.memory_space<vmem>>, vector<8x1xi32>
    %2 = tpu.iota {dimensions = array<i32: 0>} : vector<8x1xi32>
    %c8_i32 = arith.constant 8 : i32
    %3 = arith.muli %arg0, %c8_i32 : i32
    %4 = vector.broadcast %3 : i32 to vector<8x1xi32>
    %5 = arith.addi %2, %4 : vector<8x1xi32>
    %c8_i32_3 = arith.constant 8 : i32
    %6 = vector.broadcast %c8_i32_3 : i32 to vector<8x1xi32>
    %7 = arith.cmpi slt, %5, %6 : vector<8x1xi32>
    %c-1_i32 = arith.constant -1 : i32
    %8 = vector.broadcast %c-1_i32 : i32 to vector<8x1xi32>
    %9 = arith.select %7, %1, %8 : vector<8x1xi1>, vector<8x1xi32>
    %10 = tpu.iota {dimensions = array<i32: 1>} : vector<8x32xi32>
    %11 = vector.broadcast %9 : vector<8x1xi32> to vector<8x32xi32>
    %12 = arith.cmpi eq, %10, %11 : vector<8x32xi32>
    %cst = arith.constant 1.000000e+00 : f32
    %13 = vector.broadcast %cst : f32 to vector<8x32xf32>
    %14 = arith.select %12, %0, %13 : vector<8x32xi1>, vector<8x32xf32>
    %15 = math.log %14 : vector<8x32xf32>
    %cst_4 = arith.constant 1.000000e+00 : f32
    %16 = vector.broadcast %cst_4 : f32 to vector<8x32xf32>
    %17 = arith.subf %16, %14 : vector<8x32xf32>
    %18 = arith.mulf %17, %17 : vector<8x32xf32>
    %c10_i32 = arith.constant 10 : i32
    %19 = vector.broadcast %c10_i32 : i32 to vector<8x1xi32>
    %20 = arith.cmpi sgt, %9, %19 : vector<8x1xi32>
    %21 = arith.extui %20 : vector<8x1xi1> to vector<8x1xi32>
    %22 = arith.sitofp %21 : vector<8x1xi32> to vector<8x1xf32>
    %23 = vector.broadcast %22 : vector<8x1xf32> to vector<8x32xf32>
    %24 = arith.addf %18, %23 : vector<8x32xf32>
    %25 = arith.mulf %24, %15 : vector<8x32xf32>
    %26 = vector.shape_cast %25 : vector<8x32xf32> to vector<1x8x32xf32>
    %cst_5 = arith.constant dense<0.000000e+00> : vector<1xf32>
    %27 = vector.multi_reduction <add>, %26, %cst_5 [1, 2] : vector<1x8x32xf32> to vector<1xf32>
    %28 = vector.shape_cast %27 : vector<1xf32> to vector<1x1x1xf32>
    %29 = vector.extract %28[0, 0, 0] : f32 from vector<1x1x1xf32>
    %cst_6 = arith.constant 0.000000e+00 : f32
    %30 = arith.subf %cst_6, %29 : f32
    %31 = vector.broadcast %30 : f32 to vector<1x8x128xf32>
    %c0_7 = arith.constant 0 : index
    %c0_8 = arith.constant 0 : index
    %c0_9 = arith.constant 0 : index
    %32 = vector.load %arg3[%c0_7, %c0_8, %c0_9] : memref<1x8x128xf32, #tpu.memory_space<vmem>>, vector<1x8x128xf32>
    tpu.vector_store %arg3[%c0_7, %c0_8, %c0_9], %31 {strides = array<i32>} : memref<1x8x128xf32, #tpu.memory_space<vmem>>, vector<1x8x128xf32>,
    return
  }
  func.func @transform_0(%arg0: i32) -> (i32, i32) {
    %c0_i32 = arith.constant 0 : i32
    %c0_i32_0 = arith.constant 0 : i32
    return %arg0, %c0_i32 : i32, i32
  }
  func.func @transform_1(%arg0: i32) -> (i32, i32) {
    %c0_i32 = arith.constant 0 : i32
    %c0_i32_0 = arith.constant 0 : i32
    return %arg0, %c0_i32 : i32, i32
  }
  func.func @transform_2(%arg0: i32) -> (i32, i32, i32) {
    %c0_i32 = arith.constant 0 : i32
    %c0_i32_0 = arith.constant 0 : i32
    %c0_i32_1 = arith.constant 0 : i32
    return %arg0, %c0_i32, %c0_i32_0 : i32, i32, i32
  }
}

</mosaic_0001>

<llo_original>
// kernel: tpu_custom_call.1
$region0: #{tpu_custom_call.1}
  #allocation0 [shape = 'u32[]', space=smem, size = 0x4, offset = 0x4, fixed_abs, tag = 'smem constant byte address 0x4 - core index']
  #allocation1 [shape = 'u32[144,128]{1,0:T(1,128)}', space=vmem, size = 0x12000, scoped, tag = 'internal scratch']
  %s0 = inlined_call_operand.vmem [shape: f32[8,32], index: 0, kind: input, shape index: {}]
  %s1 = inlined_call_operand.vmem [shape: s32[8,1], index: 1, kind: input, shape index: {}]
  %s2 = inlined_call_operand.hbm [shape: f32[1,8,128], index: 2, kind: output, shape index: {}]
  %s3 = sld [smem:[#allocation0]]
  $region18: #{tpu_custom_call.1} parent=0
    _
  %s5 = ssub.s32 1, %s3
  %s6 = scalar_select 0, %s5, %s3
  $region1: #{tpu_custom_call.1} parent=0
    #allocation2 [shape = 'u8[4096]{0}', space=vmem, size = 0x1000, scoped, tag = 'output window, operand 0, single buffered']
    #allocation3 [shape = 's32[1]{0}', space=sflag, size = 0x4, scoped, tag = 'scoped memory for tpu_custom_call.1']
    %7 = vsyncpa [#allocation3], 0
    // Predicated region
    $region2: #{tpu_custom_call.1} parent=1 // pred_check
      _
    $region3: #{tpu_custom_call.1} parent=1 // pred_check_branch
      %9 = sbr.rel (0) target = $region5
    $region4: #{tpu_custom_call.1} parent=1 // pred_region
      _
    $region5: #{tpu_custom_call.1} parent=1 // pred_fallthru
      _
    // Predicated region
    $region6: #{tpu_custom_call.1} parent=1 // pred_check
      _
    $region7: #{tpu_custom_call.1} parent=1 // pred_check_branch
      %11 = sbr.rel (0) target = $region9
    $region8: #{tpu_custom_call.1} parent=1 // pred_region
      _
    $region9: #{tpu_custom_call.1} parent=1 // pred_fallthru
      _
    %v12 = vld [vmem:[%s0] sm:$0xff]
    %v13 = vld [vmem:[%s1] sm:$0xff]
    %v14 = vlaneseq
    %v15 = vshrl.u32 %v14, 7
    %s16 = smul.u32 0, 8
    %v17 = vstv %s16
    %v18 = vadd.s32 %v15, %v17
    %vm19 = vcmp.lt.s32.totalorder %v18, 8
    %v20 = vsel %vm19, %v13, 4294967295
    %v21 = vlaneseq
    %v22 = vand.u32 %v21, 127
    %23 = vset.pattern.permute.xlu0 0
    %24 = vperm.xlu0 %23, %v20
    %v25 = vpop.permute.xlu0 %24
    %vm26 = vcmp.eq.s32.totalorder %v22, %v25
    %v27 = vsel %vm26, %v12, 1.0
    %v28 = vlog2.pop %v27
    %v29 = vmul.f32 %v28, 0.6931472
    %v30 = vsub.f32 1.0, %v27
    %v31 = vmul.f32 %v30, %v30
    %vm32 = vcmp.gt.s32.totalorder %v20, 10
    %v33 = vsel %vm32, 1, 0
    %v34 = vcvt.s32.f32 %v33
    %36 = vset.pattern.permute.xlu0 0
    %37 = vperm.xlu0 %36, %v34
    %v38 = vpop.permute.xlu0 %37
    %v40 = vadd.f32 %v31, %v38
    %v41 = vmul.f32 %v40, %v29
    %vm42 = vcmask 261120
    %v43 = vsel %vm42, %v41, 0.0
    %44 = vadd.xlane.f32.xlu0 %v43
    %v45 = vpop.xlane.xlu0 %44
    %v46 = vrot.slane %v45, 4
    %v47 = vadd.f32 %v45, %v46
    %v48 = vrot.slane %v47, 2
    %v49 = vadd.f32 %v47, %v48
    %v50 = vrot.slane %v49, 1
    %v51 = vadd.f32 %v49, %v50
    %s52 = vtos %v51
    %s53 = ssub.f32 0.0, %s52
    %v54 = vstv %s53
    %55 = vst [vmem:[#allocation2] sm:$0xff] %v54
    // Predicated region
    $region10: #{tpu_custom_call.1} parent=1 // pred_check
      _
    $region11: #{tpu_custom_call.1} parent=1 // pred_check_branch
      %57 = sbr.rel (0) target = $region13
    $region12: #{tpu_custom_call.1} parent=1 // pred_region
      %s59 = ssub.s32 128, 128
      %60 = vsyncadd [#allocation3], %s59
      %s62 = sshll.u32 [#allocation2], 4
      %s63 = int_to_ptr.vmem [resolvable:$true] %s62
      %65 = dma.vmem_to_hbm [thread:$0]  %s63, 128, %s2, [#allocation3]
    $region13: #{tpu_custom_call.1} parent=1 // pred_fallthru
      _
    // Predicated region
    $region14: #{tpu_custom_call.1} parent=1 // pred_check
      _
    $region15: #{tpu_custom_call.1} parent=1 // pred_check_branch
      %67 = sbr.rel (0) target = $region17
    $region16: #{tpu_custom_call.1} parent=1 // pred_region
      %68 = dma.done [#allocation3], 128
    $region17: #{tpu_custom_call.1} parent=1 // pred_fallthru
      _
    %69 = vsyncpa [#allocation3], 1

</llo_original>
